<compile_context>
chip_gen: v7x
topology: tpu7x:2x2x1
jax: 0.10.0
libtpu: 0.0.40
codegen_flags: <defaults>
</compile_context>

<pallas_src>
import functools

import jax
import jax.numpy as jnp
from jax import lax
from jax.experimental import pallas as pl
from jax.experimental.pallas import tpu as pltpu

SMOOTHNESS_WEIGHT = 0.5       # module default: TemporalConsistencyLoss(smoothness_weight=0.5)
MAX_ROWS_PER_TILE = 32768     # 32768 rows x 16 f32 = 2 MiB per input block


def _cdiv(a, b):
    return -(-a // b)


def _tcl_kernel(mu_c_ref, mu_p_ref, sig_ref, out_ref, *,
                inv_d, smoothness_weight, rows_per_tile, batch_size, needs_mask):
    """One batch tile of shape (TR, D) in native layout; out_ref is a resident (8, 128)
    accumulator block holding the running loss sum (broadcast over the block)."""
    i = pl.program_id(0)

    @pl.when(i == 0)
    def _init():
        out_ref[...] = jnp.zeros_like(out_ref)

    # Per-tile cast: no-op for f32 inputs, halves HBM traffic for bf16 inputs.
    mu_c = mu_c_ref[...].astype(jnp.float32)      # (TR, D)
    mu_p = mu_p_ref[...].astype(jnp.float32)
    sig = sig_ref[...].astype(jnp.float32)

    diff = mu_c - mu_p
    # Per-sample reductions over the small embed dim (D=16 lanes).
    d2 = jnp.sum(diff * diff, axis=-1, keepdims=True)            # (TR, 1)  ||mu_c-mu_p||^2
    sig_mean = jnp.sum(sig, axis=-1, keepdims=True) * inv_d       # (TR, 1)  mean(sigma)

    uw = 1.0 / (1.0 + sig_mean)                                    # exact f32 divide
    td = jnp.sqrt(d2)                                              # EUP
    loss = uw * d2 + smoothness_weight * td                        # (TR, 1) per-sample loss

    if needs_mask:
        # Ragged last tile: rows >= batch_size hold unspecified data; select them to 0
        # (jnp.where, so even NaN/Inf garbage cannot leak into the sum).
        row = lax.broadcasted_iota(jnp.int32, loss.shape, 0)
        global_row = i * rows_per_tile + row
        loss = jnp.where(global_row < batch_size, loss, 0.0)

    out_ref[...] += jnp.sum(loss)                                  # accumulate in resident block


def temporal_consistency_loss(mu_current, mu_previous, sigma_current,
                              smoothness_weight=SMOOTHNESS_WEIGHT,
                              max_rows_per_tile=MAX_ROWS_PER_TILE,
                              vmem_limit_bytes=None):
    """mu_current, mu_previous, sigma_current: [batch, embed_dim] arrays. Returns scalar."""
    B, D = mu_current.shape

    if B <= max_rows_per_tile:
        # Whole array is one block (block == full array dims, always layout-legal).
        rows_per_tile, num_tiles, needs_mask = B, 1, False
    else:
        rows_per_tile = max_rows_per_tile                # multiple of 8
        num_tiles = _cdiv(B, rows_per_tile)
        needs_mask = (num_tiles * rows_per_tile != B)    # ragged last tile

    kernel = functools.partial(
        _tcl_kernel,
        inv_d=1.0 / D,
        smoothness_weight=float(smoothness_weight),
        rows_per_tile=rows_per_tile,
        batch_size=B,
        needs_mask=needs_mask,
    )

    in_spec = pl.BlockSpec((rows_per_tile, D), lambda i: (i, 0))

    cp_kwargs = dict(dimension_semantics=("arbitrary",))
    if vmem_limit_bytes is not None:
        cp_kwargs["vmem_limit_bytes"] = int(vmem_limit_bytes)

    out = pl.pallas_call(
        kernel,
        out_shape=jax.ShapeDtypeStruct((8, 128), jnp.float32),
        grid=(num_tiles,),
        in_specs=[in_spec, in_spec, in_spec],
        out_specs=pl.BlockSpec((8, 128), lambda i: (0, 0)),
        compiler_params=pltpu.CompilerParams(**cp_kwargs),
    )(mu_current, mu_previous, sigma_current)

    # The resident block holds the broadcast loss sum; mean over the true batch size.
    return out[0, 0] / B


def _reference(mu_current, mu_previous, sigma_current, smoothness_weight=SMOOTHNESS_WEIGHT):
    diff = mu_current - mu_previous
    temporal_distance = jnp.linalg.norm(diff, axis=-1)
    uncertainty_weight = 1.0 / (1.0 + sigma_current.mean(axis=-1))
    consistency_loss = uncertainty_weight * temporal_distance ** 2
    smoothness_penalty = smoothness_weight * temporal_distance
    return (consistency_loss + smoothness_penalty).mean()


if __name__ == "__main__":
    key = jax.random.PRNGKey(0)
    k1, k2, k3 = jax.random.split(key, 3)

    # Shapes from the module spec: [batch, 16].
    batch, embed_dim = 2, 16
    mu_current = jax.random.normal(k1, (batch, embed_dim), dtype=jnp.float32)
    mu_previous = jax.random.normal(k2, (batch, embed_dim), dtype=jnp.float32)
    # sigma is an uncertainty -> keep positive (as a softplus-like head would produce)
    sigma_current = jax.nn.softplus(
        jax.random.normal(k3, (batch, embed_dim), dtype=jnp.float32))

    loss = jax.jit(temporal_consistency_loss)(mu_current, mu_previous, sigma_current)
    loss = jax.block_until_ready(loss)
    ref = _reference(mu_current, mu_previous, sigma_current)
    assert jnp.allclose(loss, ref, atol=1e-5, rtol=1e-4), (loss, ref)

    # Secondary check: batch not a multiple of 8 / of the tile size, multiple grid tiles
    # with a ragged (masked) final tile exercising the accumulator + mask path.
    kb1, kb2, kb3 = jax.random.split(jax.random.PRNGKey(1), 3)
    B2 = 300
    mc2 = jax.random.normal(kb1, (B2, embed_dim), dtype=jnp.float32)
    mp2 = jax.random.normal(kb2, (B2, embed_dim), dtype=jnp.float32)
    sc2 = jax.nn.softplus(jax.random.normal(kb3, (B2, embed_dim), dtype=jnp.float32))
    ref2 = _reference(mc2, mp2, sc2)

    # (a) single-block path (whole array as one block)
    loss2a = jax.block_until_ready(temporal_consistency_loss(mc2, mp2, sc2))
    assert jnp.allclose(loss2a, ref2, atol=1e-5, rtol=1e-4), (loss2a, ref2)

    # (b) multi-tile + ragged-tail mask path (tiny tile cap to force 3 tiles, last ragged)
    loss2b = jax.block_until_ready(
        temporal_consistency_loss(mc2, mp2, sc2, max_rows_per_tile=128))
    assert jnp.allclose(loss2b, ref2, atol=1e-5, rtol=1e-4), (loss2b, ref2)

    # (c) bf16 streaming path (cast happens per-tile inside the kernel)
    loss2c = jax.block_until_ready(
        temporal_consistency_loss(mc2.astype(jnp.bfloat16), mp2.astype(jnp.bfloat16),
                                  sc2.astype(jnp.bfloat16), max_rows_per_tile=128))
    assert jnp.allclose(loss2c, ref2, atol=2e-2, rtol=2e-2), (loss2c, ref2)

    print("KERNEL_OK")
</pallas_src>

<mosaic_0001>
module attributes {stable_mosaic.version = 11 : i64} {
  func.func @_tcl_kernel(%arg0: i32, %arg1: memref<2x16xf32, #tpu.memory_space<vmem>>, %arg2: memref<2x16xf32, #tpu.memory_space<vmem>>, %arg3: memref<2x16xf32, #tpu.memory_space<vmem>>, %arg4: memref<8x128xf32, #tpu.memory_space<vmem>>) attributes {dimension_semantics = [#tpu.dimension_semantics<arbitrary>], iteration_bounds = array<i64: 1>, scalar_prefetch = 0 : i64, scratch_operands = 0 : i64, tpu.core_type = #tpu.core_type<tc>, window_params = [{transform_indices = @transform_0, window_bounds = array<i64: 2, 16>}, {transform_indices = @transform_1, window_bounds = array<i64: 2, 16>}, {transform_indices = @transform_2, window_bounds = array<i64: 2, 16>}, {pipeline_mode = #tpu.pipeline_mode<synchronous>, transform_indices = @transform_3, window_bounds = array<i64: 8, 128>}]} {
    %c0_i32 = arith.constant 0 : i32
    %0 = arith.cmpi eq, %arg0, %c0_i32 : i32
    %1 = arith.extui %0 : i1 to i32
    %c0_i32_0 = arith.constant 0 : i32
    %2 = arith.cmpi ne, %1, %c0_i32_0 : i32
    scf.if %2 {
      %cst_16 = arith.constant 0.000000e+00 : f32
      %31 = vector.broadcast %cst_16 : f32 to vector<8x128xf32>
      %c0_17 = arith.constant 0 : index
      %c0_18 = arith.constant 0 : index
      %32 = vector.load %arg4[%c0_17, %c0_18] : memref<8x128xf32, #tpu.memory_space<vmem>>, vector<8x128xf32>
      tpu.vector_store %arg4[%c0_17, %c0_18], %31 {strides = array<i32>} : memref<8x128xf32, #tpu.memory_space<vmem>>, vector<8x128xf32>,
    } else {
    }
    %c0 = arith.constant 0 : index
    %c0_1 = arith.constant 0 : index
    %3 = vector.load %arg1[%c0, %c0_1] : memref<2x16xf32, #tpu.memory_space<vmem>>, vector<2x16xf32>
    %c0_2 = arith.constant 0 : index
    %c0_3 = arith.constant 0 : index
    %4 = vector.load %arg2[%c0_2, %c0_3] : memref<2x16xf32, #tpu.memory_space<vmem>>, vector<2x16xf32>
    %c0_4 = arith.constant 0 : index
    %c0_5 = arith.constant 0 : index
    %5 = vector.load %arg3[%c0_4, %c0_5] : memref<2x16xf32, #tpu.memory_space<vmem>>, vector<2x16xf32>
    %6 = arith.subf %3, %4 : vector<2x16xf32>
    %7 = arith.mulf %6, %6 : vector<2x16xf32>
    %cst = arith.constant dense<0.000000e+00> : vector<2xf32>
    %8 = vector.multi_reduction <add>, %7, %cst [1] : vector<2x16xf32> to vector<2xf32>
    %9 = vector.shape_cast %8 : vector<2xf32> to vector<2x1xf32>
    %cst_6 = arith.constant dense<0.000000e+00> : vector<2xf32>
    %10 = vector.multi_reduction <add>, %5, %cst_6 [1] : vector<2x16xf32> to vector<2xf32>
    %11 = vector.shape_cast %10 : vector<2xf32> to vector<2x1xf32>
    %cst_7 = arith.constant 6.250000e-02 : f32
    %12 = vector.broadcast %cst_7 : f32 to vector<2x1xf32>
    %13 = arith.mulf %11, %12 : vector<2x1xf32>
    %cst_8 = arith.constant 1.000000e+00 : f32
    %14 = vector.broadcast %cst_8 : f32 to vector<2x1xf32>
    %15 = arith.addf %14, %13 : vector<2x1xf32>
    %cst_9 = arith.constant 1.000000e+00 : f32
    %16 = vector.broadcast %cst_9 : f32 to vector<2x1xf32>
    %17 = arith.divf %16, %15 : vector<2x1xf32>
    %18 = math.sqrt %9 : vector<2x1xf32>
    %19 = arith.mulf %17, %9 : vector<2x1xf32>
    %cst_10 = arith.constant 5.000000e-01 : f32
    %20 = vector.broadcast %cst_10 : f32 to vector<2x1xf32>
    %21 = arith.mulf %20, %18 : vector<2x1xf32>
    %22 = arith.addf %19, %21 : vector<2x1xf32>
    %c0_11 = arith.constant 0 : index
    %c0_12 = arith.constant 0 : index
    %23 = vector.load %arg4[%c0_11, %c0_12] : memref<8x128xf32, #tpu.memory_space<vmem>>, vector<8x128xf32>
    %24 = vector.shape_cast %22 : vector<2x1xf32> to vector<1x2x1xf32>
    %cst_13 = arith.constant dense<0.000000e+00> : vector<1xf32>
    %25 = vector.multi_reduction <add>, %24, %cst_13 [1, 2] : vector<1x2x1xf32> to vector<1xf32>
    %26 = vector.shape_cast %25 : vector<1xf32> to vector<1x1x1xf32>
    %27 = vector.extract %26[0, 0, 0] : f32 from vector<1x1x1xf32>
    %28 = vector.broadcast %27 : f32 to vector<8x128xf32>
    %29 = arith.addf %23, %28 : vector<8x128xf32>
    %c0_14 = arith.constant 0 : index
    %c0_15 = arith.constant 0 : index
    %30 = vector.load %arg4[%c0_14, %c0_15] : memref<8x128xf32, #tpu.memory_space<vmem>>, vector<8x128xf32>
    tpu.vector_store %arg4[%c0_14, %c0_15], %29 {strides = array<i32>} : memref<8x128xf32, #tpu.memory_space<vmem>>, vector<8x128xf32>,
    return
  }
  func.func @transform_0(%arg0: i32) -> (i32, i32) {
    %c0_i32 = arith.constant 0 : i32
    %c0_i32_0 = arith.constant 0 : i32
    return %arg0, %c0_i32 : i32, i32
  }
  func.func @transform_1(%arg0: i32) -> (i32, i32) {
    %c0_i32 = arith.constant 0 : i32
    %c0_i32_0 = arith.constant 0 : i32
    return %arg0, %c0_i32 : i32, i32
  }
  func.func @transform_2(%arg0: i32) -> (i32, i32) {
    %c0_i32 = arith.constant 0 : i32
    %c0_i32_0 = arith.constant 0 : i32
    return %arg0, %c0_i32 : i32, i32
  }
  func.func @transform_3(%arg0: i32) -> (i32, i32) {
    %c0_i32 = arith.constant 0 : i32
    %c0_i32_0 = arith.constant 0 : i32
    %c0_i32_1 = arith.constant 0 : i32
    return %c0_i32, %c0_i32_0 : i32, i32
  }
}

</mosaic_0001>

<llo_original>
// kernel: temporal_consistency_loss.1
$region0: #{temporal_consistency_loss.1}
  #allocation0 [shape = 'u32[]', space=smem, size = 0x4, offset = 0x4, fixed_abs, tag = 'smem constant byte address 0x4 - core index']
  #allocation1 [shape = 'u32[144,128]{1,0:T(1,128)}', space=vmem, size = 0x12000, scoped, tag = 'internal scratch']
  %s0 = inlined_call_operand.hbm [shape: f32[2,16], index: 0, kind: input, shape index: {}]
  %s1 = inlined_call_operand.vmem [shape: f32[2,16], index: 1, kind: input, shape index: {}]
  %s2 = inlined_call_operand.vmem [shape: f32[2,16], index: 2, kind: input, shape index: {}]
  %s3 = inlined_call_operand.vmem [shape: f32[8,128], index: 3, kind: output, shape index: {}]
  %s4 = sld [smem:[#allocation0]]
  $region30: #{temporal_consistency_loss.1} parent=0
    _
  %s6 = ssub.s32 1, %s4
  %s7 = scalar_select 0, %s6, %s4
  $region1: #{temporal_consistency_loss.1} parent=0
    #allocation2 [shape = 'u8[1024]{0}', space=vmem, size = 0x400, scoped, tag = 'input window, operand 0, single buffered']
    #allocation3 [shape = 's32[1]{0}', space=sflag, size = 0x4, scoped, tag = 'scoped memory for temporal_consistency_loss.1']
    %8 = vsyncpa [#allocation3], 0
    // Predicated region
    $region2: #{temporal_consistency_loss.1} parent=1 // pred_check
      _
    $region3: #{temporal_consistency_loss.1} parent=1 // pred_check_branch
      %10 = sbr.rel (0) target = $region5
    $region4: #{temporal_consistency_loss.1} parent=1 // pred_region
      %s12 = ssub.s32 32, 32
      %13 = vsyncadd [#allocation3], %s12
      %s15 = sshll.u32 [#allocation2], 4
      %s16 = int_to_ptr.vmem [resolvable:$true] %s15
      %18 = dma.hbm_to_vmem [thread:$0]  %s0, 32, %s16, [#allocation3]
    $region5: #{temporal_consistency_loss.1} parent=1 // pred_fallthru
      _
    // Predicated region
    $region6: #{temporal_consistency_loss.1} parent=1 // pred_check
      _
    $region7: #{temporal_consistency_loss.1} parent=1 // pred_check_branch
      %20 = sbr.rel (0) target = $region9
    $region8: #{temporal_consistency_loss.1} parent=1 // pred_region
      _
    $region9: #{temporal_consistency_loss.1} parent=1 // pred_fallthru
      _
    // Predicated region
    $region10: #{temporal_consistency_loss.1} parent=1 // pred_check
      _
    $region11: #{temporal_consistency_loss.1} parent=1 // pred_check_branch
      %22 = sbr.rel (0) target = $region13
    $region12: #{temporal_consistency_loss.1} parent=1 // pred_region
      _
    $region13: #{temporal_consistency_loss.1} parent=1 // pred_fallthru
      _
    // Predicated region
    $region14: #{temporal_consistency_loss.1} parent=1 // pred_check
      _
    $region15: #{temporal_consistency_loss.1} parent=1 // pred_check_branch
      %24 = sbr.rel (0) target = $region17
    $region16: #{temporal_consistency_loss.1} parent=1 // pred_region
      %25 = dma.done [#allocation3], 32
    $region17: #{temporal_consistency_loss.1} parent=1 // pred_fallthru
      _
    %p26 = scmp.eq.s32.totalorder 0, 0
    // Predicated region
    $region18: #{temporal_consistency_loss.1} parent=1 // pred_check
      %p27 = pneg %p26
    $region19: #{temporal_consistency_loss.1} parent=1 // pred_check_branch
      %29 = sbr.rel (%p27) target = $region21
    $region20: #{temporal_consistency_loss.1} parent=1 // pred_region
      %30 = vst [vmem:[%s3] sm:$0xff] 0.0
    $region21: #{temporal_consistency_loss.1} parent=1 // pred_fallthru
      _
    %v31 = vld [vmem:[#allocation2] sm:$0x3]
    %v32 = vld [vmem:[%s1] sm:$0x3]
    %v33 = vld [vmem:[%s2] sm:$0x3]
    %v34 = vsub.f32 %v31, %v32
    %v35 = vmul.f32 %v34, %v34
    %vm36 = vcmask 123904
    %v37 = vsel %vm36, %v35, 0.0
    %38 = vadd.xlane.f32.xlu0 %v37
    %v39 = vpop.xlane.xlu0 %38
    %v40 = vsel %vm36, %v33, 0.0
    %41 = vadd.xlane.f32.xlu0 %v40
    %v42 = vpop.xlane.xlu0 %41
    %v43 = vmul.f32 %v42, 0.0625
    %v44 = vadd.f32 %v43, 1.0
    %v45 = vrcp.pop %v44
    %v46 = vmul.f32 1.0, %v45
    %v47 = vrsqrt.pop %v39
    %v48 = vmul.f32 %v39, %v47
    %vm49 = vcmp.eq.f32.partialorder %v39, inf
    %v50 = vsel %vm49, %v39, %v48
    %vm51 = vcmp.eq.f32.partialorder %v39, 0.0
    %v52 = vand.u32 %v39, 2147483648
    %v53 = vsel %vm51, %v52, %v50
    %v54 = vmul.f32 %v46, %v39
    %v55 = vmul.f32 %v53, 0.5
    %v56 = vadd.f32 %v54, %v55
    %v57 = vld [vmem:[%s3] sm:$0xff]
    %vm58 = vcmask 1024
    %v59 = vsel %vm58, %v56, 0.0
    %60 = vadd.xlane.f32.xlu0 %v59
    %v61 = vpop.xlane.xlu0 %60
    %v62 = vrot.slane %v61, 4
    %v63 = vadd.f32 %v61, %v62
    %v64 = vrot.slane %v63, 2
    %v65 = vadd.f32 %v63, %v64
    %v66 = vrot.slane %v65, 1
    %v67 = vadd.f32 %v65, %v66
    %s68 = vtos %v67
    %v69 = vstv %s68
    %v70 = vadd.f32 %v57, %v69
    %71 = vst [vmem:[%s3] sm:$0xff] %v70
    // Predicated region
    $region22: #{temporal_consistency_loss.1} parent=1 // pred_check
      _
    $region23: #{temporal_consistency_loss.1} parent=1 // pred_check_branch
      %73 = sbr.rel (0) target = $region25
    $region24: #{temporal_consistency_loss.1} parent=1 // pred_region
      _
    $region25: #{temporal_consistency_loss.1} parent=1 // pred_fallthru
      _
    // Predicated region
    $region26: #{temporal_consistency_loss.1} parent=1 // pred_check
      _
    $region27: #{temporal_consistency_loss.1} parent=1 // pred_check_branch
      %75 = sbr.rel (0) target = $region29
    $region28: #{temporal_consistency_loss.1} parent=1 // pred_region
      _
    $region29: #{temporal_consistency_loss.1} parent=1 // pred_fallthru
      _
    %76 = vsyncpa [#allocation3], 1

</llo_original>
